<compile_context>
chip_gen: v6e
topology: v6e:2x2x1
jax: 0.10.0
libtpu: 0.0.40
codegen_flags: <defaults>
</compile_context>

<pallas_src>
import functools

import jax
import jax.numpy as jnp
from jax.experimental import pallas as pl
from jax.experimental.pallas import tpu as pltpu


def _conv_clamp_kernel(x_ref, w_ref, b_ref, o_ref, *, wp, c_in, c_out, l_out):
    """One image per grid step.

    x_ref: (1, C_in, Lp_in)   zero-padded image, spatial dims flattened with row
                              stride `wp` (= W + 2), lane-padded with zeros.
    w_ref: (C_out, 9*C_in)    weights ordered (dy, dx) major, ci minor.
    b_ref: (C_out, 1)         bias.
    o_ref: (1, C_out, L_out)  flattened output; position p = y*wp + x is valid
                              for x < W (garbage columns sliced off in wrapper).
    """
    # Init accumulator with the bias (free VPU broadcast-add).
    acc = jnp.broadcast_to(b_ref[...], (c_out, l_out)).astype(jnp.float32)

    # 3x3 conv as 9 shifted views of the resident padded image: for output
    # position p (flat), tap (dy, dx) reads input position p + dy*wp + dx.
    for dy in range(3):
        for dx in range(3):
            off = dy * wp + dx
            xs = x_ref[0, :, off:off + l_out]          # (C_in, L_out) static lane slice
            base = (dy * 3 + dx) * c_in
            for ci in range(c_in):
                wcol = w_ref[:, base + ci:base + ci + 1]   # (C_out, 1)
                acc = acc + wcol * xs[ci:ci + 1, :]        # (C_out, L_out) VPU FMA

    # clamp(min=1/3) then clamp(max=3)
    acc = jnp.maximum(acc, jnp.float32(1.0 / 3.0))
    acc = jnp.minimum(acc, jnp.float32(3.0))
    o_ref[0] = acc.astype(o_ref.dtype)


def conv2d_clamp(x_nchw, weight, bias):
    """x_nchw: (N, C_in, H, W) f32; weight: (C_out, C_in, 3, 3); bias: (C_out,)"""
    N, C_in, H, W = x_nchw.shape
    C_out = weight.shape[0]
    Hp, Wp = H + 2, W + 2

    # Lane-dense compute/output width (multiple of 128) and input lane padding so
    # every shifted slice [off, off + L_out) stays in bounds (max off = 2*Wp + 2).
    L_out = pl.cdiv(H * Wp, 128) * 128
    Lp_in = pl.cdiv(L_out + 2 * Wp + 2, 128) * 128

    # Only wrapper-side prep: zero-pad spatially, flatten (Hp, Wp) -> one lane
    # axis, zero-pad lanes.  Fuses into ~one XLA copy; no im2col blowup in HBM.
    x_flat = jnp.pad(x_nchw, ((0, 0), (0, 0), (1, 1), (1, 1))).reshape(N, C_in, Hp * Wp)
    x_flat = jnp.pad(x_flat, ((0, 0), (0, 0), (0, Lp_in - Hp * Wp)))

    # Weights ordered (dy, dx, ci); bias as a column.
    w2 = jnp.transpose(weight, (0, 2, 3, 1)).reshape(C_out, 9 * C_in)
    b2 = bias.reshape(C_out, 1)

    kernel = functools.partial(_conv_clamp_kernel,
                               wp=Wp, c_in=C_in, c_out=C_out, l_out=L_out)

    out = pl.pallas_call(
        kernel,
        out_shape=jax.ShapeDtypeStruct((N, C_out, L_out), x_nchw.dtype),
        grid_spec=pltpu.PrefetchScalarGridSpec(
            num_scalar_prefetch=0,
            grid=(N,),                               # one image per step
            in_specs=[
                pl.BlockSpec((1, C_in, Lp_in), lambda n: (n, 0, 0)),
                pl.BlockSpec((C_out, 9 * C_in), lambda n: (0, 0)),
                pl.BlockSpec((C_out, 1), lambda n: (0, 0)),
            ],
            out_specs=pl.BlockSpec((1, C_out, L_out), lambda n: (n, 0, 0)),
        ),
        compiler_params=pltpu.CompilerParams(
            dimension_semantics=("parallel",)),      # images independent -> both TCs on v7x
    )(x_flat, w2, b2)

    # Flat (y*Wp + x) positions back to NCHW: drop the 2 garbage padding columns.
    return out[:, :, :H * Wp].reshape(N, C_out, H, Wp)[:, :, :, :W]


def reference(x_nchw, weight, bias):
    y = jax.lax.conv_general_dilated(
        x_nchw, weight, window_strides=(1, 1), padding=((1, 1), (1, 1)),
        dimension_numbers=("NCHW", "OIHW", "NCHW"))
    y = y + bias.reshape(1, -1, 1, 1)
    return jnp.clip(y, 1.0 / 3.0, 3.0)


if __name__ == "__main__":
    key = jax.random.PRNGKey(0)
    kx, kw, kb = jax.random.split(key, 3)

    N, C_in, H, W = 2, 3, 16, 16
    C_out = 8

    x = jax.random.normal(kx, (N, C_in, H, W), dtype=jnp.float32)
    # deterministic parameter init (PyTorch-like uniform fan-in scaling)
    fan_in = C_in * 3 * 3
    bound = 1.0 / (fan_in ** 0.5)
    weight = jax.random.uniform(kw, (C_out, C_in, 3, 3), jnp.float32,
                                minval=-bound, maxval=bound)
    bias = jax.random.uniform(kb, (C_out,), jnp.float32,
                              minval=-bound, maxval=bound)

    y = conv2d_clamp(x, weight, bias)
    y = jax.block_until_ready(y)

    y_ref = reference(x, weight, bias)
    assert y.shape == (N, C_out, H, W)
    assert jnp.allclose(y, y_ref, atol=1e-5, rtol=1e-5)

    print("KERNEL_OK")
</pallas_src>

<mosaic_0001>
module attributes {stable_mosaic.version = 11 : i64} {
  func.func @_conv_clamp_kernel(%arg0: i32, %arg1: memref<1x3x512xf32, #tpu.memory_space<vmem>>, %arg2: memref<8x27xf32, #tpu.memory_space<vmem>>, %arg3: memref<8x1xf32, #tpu.memory_space<vmem>>, %arg4: memref<1x8x384xf32, #tpu.memory_space<vmem>>) attributes {dimension_semantics = [#tpu.dimension_semantics<parallel>], iteration_bounds = array<i64: 2>, scalar_prefetch = 0 : i64, scratch_operands = 0 : i64, tpu.core_type = #tpu.core_type<tc>, window_params = [{transform_indices = @transform_0, window_bounds = array<i64: 1, 3, 512>}, {pipeline_mode = #tpu.pipeline_mode<synchronous>, transform_indices = @transform_1, window_bounds = array<i64: 8, 27>}, {pipeline_mode = #tpu.pipeline_mode<synchronous>, transform_indices = @transform_2, window_bounds = array<i64: 8, 1>}, {transform_indices = @transform_3, window_bounds = array<i64: 1, 8, 384>}]} {
    %c0 = arith.constant 0 : index
    %c0_0 = arith.constant 0 : index
    %0 = vector.load %arg3[%c0, %c0_0] : memref<8x1xf32, #tpu.memory_space<vmem>>, vector<8x1xf32>
    %1 = vector.shape_cast %0 : vector<8x1xf32> to vector<8x1xf32>
    %2 = vector.broadcast %1 : vector<8x1xf32> to vector<8x384xf32>
    %c0_1 = arith.constant 0 : index
    %c0_2 = arith.constant 0 : index
    %c0_3 = arith.constant 0 : index
    %3 = vector.load %arg1[%c0_1, %c0_2, %c0_3] : memref<1x3x512xf32, #tpu.memory_space<vmem>>, vector<1x3x384xf32>
    %4 = vector.shape_cast %3 : vector<1x3x384xf32> to vector<3x384xf32>
    %c0_4 = arith.constant 0 : index
    %c0_5 = arith.constant 0 : index
    %5 = vector.load %arg2[%c0_4, %c0_5] : memref<8x27xf32, #tpu.memory_space<vmem>>, vector<8x1xf32>
    %6 = vector.extract_strided_slice %4 {offsets = [0, 0], sizes = [1, 384], strides = [1, 1]} : vector<3x384xf32> to vector<1x384xf32>
    %7 = vector.broadcast %5 : vector<8x1xf32> to vector<8x384xf32>
    %8 = vector.broadcast %6 : vector<1x384xf32> to vector<8x384xf32>
    %9 = arith.mulf %7, %8 : vector<8x384xf32>
    %10 = arith.addf %2, %9 : vector<8x384xf32>
    %c0_6 = arith.constant 0 : index
    %c1 = arith.constant 1 : index
    %11 = vector.load %arg2[%c0_6, %c1] : memref<8x27xf32, #tpu.memory_space<vmem>>, vector<8x1xf32>
    %12 = vector.extract_strided_slice %4 {offsets = [1, 0], sizes = [1, 384], strides = [1, 1]} : vector<3x384xf32> to vector<1x384xf32>
    %13 = vector.broadcast %11 : vector<8x1xf32> to vector<8x384xf32>
    %14 = vector.broadcast %12 : vector<1x384xf32> to vector<8x384xf32>
    %15 = arith.mulf %13, %14 : vector<8x384xf32>
    %16 = arith.addf %10, %15 : vector<8x384xf32>
    %c0_7 = arith.constant 0 : index
    %c2 = arith.constant 2 : index
    %17 = vector.load %arg2[%c0_7, %c2] : memref<8x27xf32, #tpu.memory_space<vmem>>, vector<8x1xf32>
    %18 = vector.extract_strided_slice %4 {offsets = [2, 0], sizes = [1, 384], strides = [1, 1]} : vector<3x384xf32> to vector<1x384xf32>
    %19 = vector.broadcast %17 : vector<8x1xf32> to vector<8x384xf32>
    %20 = vector.broadcast %18 : vector<1x384xf32> to vector<8x384xf32>
    %21 = arith.mulf %19, %20 : vector<8x384xf32>
    %22 = arith.addf %16, %21 : vector<8x384xf32>
    %c0_8 = arith.constant 0 : index
    %c0_9 = arith.constant 0 : index
    %c1_10 = arith.constant 1 : index
    %23 = vector.load %arg1[%c0_8, %c0_9, %c1_10] : memref<1x3x512xf32, #tpu.memory_space<vmem>>, vector<1x3x384xf32>
    %24 = vector.shape_cast %23 : vector<1x3x384xf32> to vector<3x384xf32>
    %c0_11 = arith.constant 0 : index
    %c3 = arith.constant 3 : index
    %25 = vector.load %arg2[%c0_11, %c3] : memref<8x27xf32, #tpu.memory_space<vmem>>, vector<8x1xf32>
    %26 = vector.extract_strided_slice %24 {offsets = [0, 0], sizes = [1, 384], strides = [1, 1]} : vector<3x384xf32> to vector<1x384xf32>
    %27 = vector.broadcast %25 : vector<8x1xf32> to vector<8x384xf32>
    %28 = vector.broadcast %26 : vector<1x384xf32> to vector<8x384xf32>
    %29 = arith.mulf %27, %28 : vector<8x384xf32>
    %30 = arith.addf %22, %29 : vector<8x384xf32>
    %c0_12 = arith.constant 0 : index
    %c4 = arith.constant 4 : index
    %31 = vector.load %arg2[%c0_12, %c4] : memref<8x27xf32, #tpu.memory_space<vmem>>, vector<8x1xf32>
    %32 = vector.extract_strided_slice %24 {offsets = [1, 0], sizes = [1, 384], strides = [1, 1]} : vector<3x384xf32> to vector<1x384xf32>
    %33 = vector.broadcast %31 : vector<8x1xf32> to vector<8x384xf32>
    %34 = vector.broadcast %32 : vector<1x384xf32> to vector<8x384xf32>
    %35 = arith.mulf %33, %34 : vector<8x384xf32>
    %36 = arith.addf %30, %35 : vector<8x384xf32>
    %c0_13 = arith.constant 0 : index
    %c5 = arith.constant 5 : index
    %37 = vector.load %arg2[%c0_13, %c5] : memref<8x27xf32, #tpu.memory_space<vmem>>, vector<8x1xf32>
    %38 = vector.extract_strided_slice %24 {offsets = [2, 0], sizes = [1, 384], strides = [1, 1]} : vector<3x384xf32> to vector<1x384xf32>
    %39 = vector.broadcast %37 : vector<8x1xf32> to vector<8x384xf32>
    %40 = vector.broadcast %38 : vector<1x384xf32> to vector<8x384xf32>
    %41 = arith.mulf %39, %40 : vector<8x384xf32>
    %42 = arith.addf %36, %41 : vector<8x384xf32>
    %c0_14 = arith.constant 0 : index
    %c0_15 = arith.constant 0 : index
    %c2_16 = arith.constant 2 : index
    %43 = vector.load %arg1[%c0_14, %c0_15, %c2_16] : memref<1x3x512xf32, #tpu.memory_space<vmem>>, vector<1x3x384xf32>
    %44 = vector.shape_cast %43 : vector<1x3x384xf32> to vector<3x384xf32>
    %c0_17 = arith.constant 0 : index
    %c6 = arith.constant 6 : index
    %45 = vector.load %arg2[%c0_17, %c6] : memref<8x27xf32, #tpu.memory_space<vmem>>, vector<8x1xf32>
    %46 = vector.extract_strided_slice %44 {offsets = [0, 0], sizes = [1, 384], strides = [1, 1]} : vector<3x384xf32> to vector<1x384xf32>
    %47 = vector.broadcast %45 : vector<8x1xf32> to vector<8x384xf32>
    %48 = vector.broadcast %46 : vector<1x384xf32> to vector<8x384xf32>
    %49 = arith.mulf %47, %48 : vector<8x384xf32>
    %50 = arith.addf %42, %49 : vector<8x384xf32>
    %c0_18 = arith.constant 0 : index
    %c7 = arith.constant 7 : index
    %51 = vector.load %arg2[%c0_18, %c7] : memref<8x27xf32, #tpu.memory_space<vmem>>, vector<8x1xf32>
    %52 = vector.extract_strided_slice %44 {offsets = [1, 0], sizes = [1, 384], strides = [1, 1]} : vector<3x384xf32> to vector<1x384xf32>
    %53 = vector.broadcast %51 : vector<8x1xf32> to vector<8x384xf32>
    %54 = vector.broadcast %52 : vector<1x384xf32> to vector<8x384xf32>
    %55 = arith.mulf %53, %54 : vector<8x384xf32>
    %56 = arith.addf %50, %55 : vector<8x384xf32>
    %c0_19 = arith.constant 0 : index
    %c8 = arith.constant 8 : index
    %57 = vector.load %arg2[%c0_19, %c8] : memref<8x27xf32, #tpu.memory_space<vmem>>, vector<8x1xf32>
    %58 = vector.extract_strided_slice %44 {offsets = [2, 0], sizes = [1, 384], strides = [1, 1]} : vector<3x384xf32> to vector<1x384xf32>
    %59 = vector.broadcast %57 : vector<8x1xf32> to vector<8x384xf32>
    %60 = vector.broadcast %58 : vector<1x384xf32> to vector<8x384xf32>
    %61 = arith.mulf %59, %60 : vector<8x384xf32>
    %62 = arith.addf %56, %61 : vector<8x384xf32>
    %c0_20 = arith.constant 0 : index
    %c0_21 = arith.constant 0 : index
    %c18 = arith.constant 18 : index
    %63 = vector.load %arg1[%c0_20, %c0_21, %c18] : memref<1x3x512xf32, #tpu.memory_space<vmem>>, vector<1x3x384xf32>
    %64 = vector.shape_cast %63 : vector<1x3x384xf32> to vector<3x384xf32>
    %c0_22 = arith.constant 0 : index
    %c9 = arith.constant 9 : index
    %65 = vector.load %arg2[%c0_22, %c9] : memref<8x27xf32, #tpu.memory_space<vmem>>, vector<8x1xf32>
    %66 = vector.extract_strided_slice %64 {offsets = [0, 0], sizes = [1, 384], strides = [1, 1]} : vector<3x384xf32> to vector<1x384xf32>
    %67 = vector.broadcast %65 : vector<8x1xf32> to vector<8x384xf32>
    %68 = vector.broadcast %66 : vector<1x384xf32> to vector<8x384xf32>
    %69 = arith.mulf %67, %68 : vector<8x384xf32>
    %70 = arith.addf %62, %69 : vector<8x384xf32>
    %c0_23 = arith.constant 0 : index
    %c10 = arith.constant 10 : index
    %71 = vector.load %arg2[%c0_23, %c10] : memref<8x27xf32, #tpu.memory_space<vmem>>, vector<8x1xf32>
    %72 = vector.extract_strided_slice %64 {offsets = [1, 0], sizes = [1, 384], strides = [1, 1]} : vector<3x384xf32> to vector<1x384xf32>
    %73 = vector.broadcast %71 : vector<8x1xf32> to vector<8x384xf32>
    %74 = vector.broadcast %72 : vector<1x384xf32> to vector<8x384xf32>
    %75 = arith.mulf %73, %74 : vector<8x384xf32>
    %76 = arith.addf %70, %75 : vector<8x384xf32>
    %c0_24 = arith.constant 0 : index
    %c11 = arith.constant 11 : index
    %77 = vector.load %arg2[%c0_24, %c11] : memref<8x27xf32, #tpu.memory_space<vmem>>, vector<8x1xf32>
    %78 = vector.extract_strided_slice %64 {offsets = [2, 0], sizes = [1, 384], strides = [1, 1]} : vector<3x384xf32> to vector<1x384xf32>
    %79 = vector.broadcast %77 : vector<8x1xf32> to vector<8x384xf32>
    %80 = vector.broadcast %78 : vector<1x384xf32> to vector<8x384xf32>
    %81 = arith.mulf %79, %80 : vector<8x384xf32>
    %82 = arith.addf %76, %81 : vector<8x384xf32>
    %c0_25 = arith.constant 0 : index
    %c0_26 = arith.constant 0 : index
    %c19 = arith.constant 19 : index
    %83 = vector.load %arg1[%c0_25, %c0_26, %c19] : memref<1x3x512xf32, #tpu.memory_space<vmem>>, vector<1x3x384xf32>
    %84 = vector.shape_cast %83 : vector<1x3x384xf32> to vector<3x384xf32>
    %c0_27 = arith.constant 0 : index
    %c12 = arith.constant 12 : index
    %85 = vector.load %arg2[%c0_27, %c12] : memref<8x27xf32, #tpu.memory_space<vmem>>, vector<8x1xf32>
    %86 = vector.extract_strided_slice %84 {offsets = [0, 0], sizes = [1, 384], strides = [1, 1]} : vector<3x384xf32> to vector<1x384xf32>
    %87 = vector.broadcast %85 : vector<8x1xf32> to vector<8x384xf32>
    %88 = vector.broadcast %86 : vector<1x384xf32> to vector<8x384xf32>
    %89 = arith.mulf %87, %88 : vector<8x384xf32>
    %90 = arith.addf %82, %89 : vector<8x384xf32>
    %c0_28 = arith.constant 0 : index
    %c13 = arith.constant 13 : index
    %91 = vector.load %arg2[%c0_28, %c13] : memref<8x27xf32, #tpu.memory_space<vmem>>, vector<8x1xf32>
    %92 = vector.extract_strided_slice %84 {offsets = [1, 0], sizes = [1, 384], strides = [1, 1]} : vector<3x384xf32> to vector<1x384xf32>
    %93 = vector.broadcast %91 : vector<8x1xf32> to vector<8x384xf32>
    %94 = vector.broadcast %92 : vector<1x384xf32> to vector<8x384xf32>
    %95 = arith.mulf %93, %94 : vector<8x384xf32>
    %96 = arith.addf %90, %95 : vector<8x384xf32>
    %c0_29 = arith.constant 0 : index
    %c14 = arith.constant 14 : index
    %97 = vector.load %arg2[%c0_29, %c14] : memref<8x27xf32, #tpu.memory_space<vmem>>, vector<8x1xf32>
    %98 = vector.extract_strided_slice %84 {offsets = [2, 0], sizes = [1, 384], strides = [1, 1]} : vector<3x384xf32> to vector<1x384xf32>
    %99 = vector.broadcast %97 : vector<8x1xf32> to vector<8x384xf32>
    %100 = vector.broadcast %98 : vector<1x384xf32> to vector<8x384xf32>
    %101 = arith.mulf %99, %100 : vector<8x384xf32>
    %102 = arith.addf %96, %101 : vector<8x384xf32>
    %c0_30 = arith.constant 0 : index
    %c0_31 = arith.constant 0 : index
    %c20 = arith.constant 20 : index
    %103 = vector.load %arg1[%c0_30, %c0_31, %c20] : memref<1x3x512xf32, #tpu.memory_space<vmem>>, vector<1x3x384xf32>
    %104 = vector.shape_cast %103 : vector<1x3x384xf32> to vector<3x384xf32>
    %c0_32 = arith.constant 0 : index
    %c15 = arith.constant 15 : index
    %105 = vector.load %arg2[%c0_32, %c15] : memref<8x27xf32, #tpu.memory_space<vmem>>, vector<8x1xf32>
    %106 = vector.extract_strided_slice %104 {offsets = [0, 0], sizes = [1, 384], strides = [1, 1]} : vector<3x384xf32> to vector<1x384xf32>
    %107 = vector.broadcast %105 : vector<8x1xf32> to vector<8x384xf32>
    %108 = vector.broadcast %106 : vector<1x384xf32> to vector<8x384xf32>
    %109 = arith.mulf %107, %108 : vector<8x384xf32>
    %110 = arith.addf %102, %109 : vector<8x384xf32>
    %c0_33 = arith.constant 0 : index
    %c16 = arith.constant 16 : index
    %111 = vector.load %arg2[%c0_33, %c16] : memref<8x27xf32, #tpu.memory_space<vmem>>, vector<8x1xf32>
    %112 = vector.extract_strided_slice %104 {offsets = [1, 0], sizes = [1, 384], strides = [1, 1]} : vector<3x384xf32> to vector<1x384xf32>
    %113 = vector.broadcast %111 : vector<8x1xf32> to vector<8x384xf32>
    %114 = vector.broadcast %112 : vector<1x384xf32> to vector<8x384xf32>
    %115 = arith.mulf %113, %114 : vector<8x384xf32>
    %116 = arith.addf %110, %115 : vector<8x384xf32>
    %c0_34 = arith.constant 0 : index
    %c17 = arith.constant 17 : index
    %117 = vector.load %arg2[%c0_34, %c17] : memref<8x27xf32, #tpu.memory_space<vmem>>, vector<8x1xf32>
    %118 = vector.extract_strided_slice %104 {offsets = [2, 0], sizes = [1, 384], strides = [1, 1]} : vector<3x384xf32> to vector<1x384xf32>
    %119 = vector.broadcast %117 : vector<8x1xf32> to vector<8x384xf32>
    %120 = vector.broadcast %118 : vector<1x384xf32> to vector<8x384xf32>
    %121 = arith.mulf %119, %120 : vector<8x384xf32>
    %122 = arith.addf %116, %121 : vector<8x384xf32>
    %c0_35 = arith.constant 0 : index
    %c0_36 = arith.constant 0 : index
    %c36 = arith.constant 36 : index
    %123 = vector.load %arg1[%c0_35, %c0_36, %c36] : memref<1x3x512xf32, #tpu.memory_space<vmem>>, vector<1x3x384xf32>
    %124 = vector.shape_cast %123 : vector<1x3x384xf32> to vector<3x384xf32>
    %c0_37 = arith.constant 0 : index
    %c18_38 = arith.constant 18 : index
    %125 = vector.load %arg2[%c0_37, %c18_38] : memref<8x27xf32, #tpu.memory_space<vmem>>, vector<8x1xf32>
    %126 = vector.extract_strided_slice %124 {offsets = [0, 0], sizes = [1, 384], strides = [1, 1]} : vector<3x384xf32> to vector<1x384xf32>
    %127 = vector.broadcast %125 : vector<8x1xf32> to vector<8x384xf32>
    %128 = vector.broadcast %126 : vector<1x384xf32> to vector<8x384xf32>
    %129 = arith.mulf %127, %128 : vector<8x384xf32>
    %130 = arith.addf %122, %129 : vector<8x384xf32>
    %c0_39 = arith.constant 0 : index
    %c19_40 = arith.constant 19 : index
    %131 = vector.load %arg2[%c0_39, %c19_40] : memref<8x27xf32, #tpu.memory_space<vmem>>, vector<8x1xf32>
    %132 = vector.extract_strided_slice %124 {offsets = [1, 0], sizes = [1, 384], strides = [1, 1]} : vector<3x384xf32> to vector<1x384xf32>
    %133 = vector.broadcast %131 : vector<8x1xf32> to vector<8x384xf32>
    %134 = vector.broadcast %132 : vector<1x384xf32> to vector<8x384xf32>
    %135 = arith.mulf %133, %134 : vector<8x384xf32>
    %136 = arith.addf %130, %135 : vector<8x384xf32>
    %c0_41 = arith.constant 0 : index
    %c20_42 = arith.constant 20 : index
    %137 = vector.load %arg2[%c0_41, %c20_42] : memref<8x27xf32, #tpu.memory_space<vmem>>, vector<8x1xf32>
    %138 = vector.extract_strided_slice %124 {offsets = [2, 0], sizes = [1, 384], strides = [1, 1]} : vector<3x384xf32> to vector<1x384xf32>
    %139 = vector.broadcast %137 : vector<8x1xf32> to vector<8x384xf32>
    %140 = vector.broadcast %138 : vector<1x384xf32> to vector<8x384xf32>
    %141 = arith.mulf %139, %140 : vector<8x384xf32>
    %142 = arith.addf %136, %141 : vector<8x384xf32>
    %c0_43 = arith.constant 0 : index
    %c0_44 = arith.constant 0 : index
    %c37 = arith.constant 37 : index
    %143 = vector.load %arg1[%c0_43, %c0_44, %c37] : memref<1x3x512xf32, #tpu.memory_space<vmem>>, vector<1x3x384xf32>
    %144 = vector.shape_cast %143 : vector<1x3x384xf32> to vector<3x384xf32>
    %c0_45 = arith.constant 0 : index
    %c21 = arith.constant 21 : index
    %145 = vector.load %arg2[%c0_45, %c21] : memref<8x27xf32, #tpu.memory_space<vmem>>, vector<8x1xf32>
    %146 = vector.extract_strided_slice %144 {offsets = [0, 0], sizes = [1, 384], strides = [1, 1]} : vector<3x384xf32> to vector<1x384xf32>
    %147 = vector.broadcast %145 : vector<8x1xf32> to vector<8x384xf32>
    %148 = vector.broadcast %146 : vector<1x384xf32> to vector<8x384xf32>
    %149 = arith.mulf %147, %148 : vector<8x384xf32>
    %150 = arith.addf %142, %149 : vector<8x384xf32>
    %c0_46 = arith.constant 0 : index
    %c22 = arith.constant 22 : index
    %151 = vector.load %arg2[%c0_46, %c22] : memref<8x27xf32, #tpu.memory_space<vmem>>, vector<8x1xf32>
    %152 = vector.extract_strided_slice %144 {offsets = [1, 0], sizes = [1, 384], strides = [1, 1]} : vector<3x384xf32> to vector<1x384xf32>
    %153 = vector.broadcast %151 : vector<8x1xf32> to vector<8x384xf32>
    %154 = vector.broadcast %152 : vector<1x384xf32> to vector<8x384xf32>
    %155 = arith.mulf %153, %154 : vector<8x384xf32>
    %156 = arith.addf %150, %155 : vector<8x384xf32>
    %c0_47 = arith.constant 0 : index
    %c23 = arith.constant 23 : index
    %157 = vector.load %arg2[%c0_47, %c23] : memref<8x27xf32, #tpu.memory_space<vmem>>, vector<8x1xf32>
    %158 = vector.extract_strided_slice %144 {offsets = [2, 0], sizes = [1, 384], strides = [1, 1]} : vector<3x384xf32> to vector<1x384xf32>
    %159 = vector.broadcast %157 : vector<8x1xf32> to vector<8x384xf32>
    %160 = vector.broadcast %158 : vector<1x384xf32> to vector<8x384xf32>
    %161 = arith.mulf %159, %160 : vector<8x384xf32>
    %162 = arith.addf %156, %161 : vector<8x384xf32>
    %c0_48 = arith.constant 0 : index
    %c0_49 = arith.constant 0 : index
    %c38 = arith.constant 38 : index
    %163 = vector.load %arg1[%c0_48, %c0_49, %c38] : memref<1x3x512xf32, #tpu.memory_space<vmem>>, vector<1x3x384xf32>
    %164 = vector.shape_cast %163 : vector<1x3x384xf32> to vector<3x384xf32>
    %c0_50 = arith.constant 0 : index
    %c24 = arith.constant 24 : index
    %165 = vector.load %arg2[%c0_50, %c24] : memref<8x27xf32, #tpu.memory_space<vmem>>, vector<8x1xf32>
    %166 = vector.extract_strided_slice %164 {offsets = [0, 0], sizes = [1, 384], strides = [1, 1]} : vector<3x384xf32> to vector<1x384xf32>
    %167 = vector.broadcast %165 : vector<8x1xf32> to vector<8x384xf32>
    %168 = vector.broadcast %166 : vector<1x384xf32> to vector<8x384xf32>
    %169 = arith.mulf %167, %168 : vector<8x384xf32>
    %170 = arith.addf %162, %169 : vector<8x384xf32>
    %c0_51 = arith.constant 0 : index
    %c25 = arith.constant 25 : index
    %171 = vector.load %arg2[%c0_51, %c25] : memref<8x27xf32, #tpu.memory_space<vmem>>, vector<8x1xf32>
    %172 = vector.extract_strided_slice %164 {offsets = [1, 0], sizes = [1, 384], strides = [1, 1]} : vector<3x384xf32> to vector<1x384xf32>
    %173 = vector.broadcast %171 : vector<8x1xf32> to vector<8x384xf32>
    %174 = vector.broadcast %172 : vector<1x384xf32> to vector<8x384xf32>
    %175 = arith.mulf %173, %174 : vector<8x384xf32>
    %176 = arith.addf %170, %175 : vector<8x384xf32>
    %c0_52 = arith.constant 0 : index
    %c26 = arith.constant 26 : index
    %177 = vector.load %arg2[%c0_52, %c26] : memref<8x27xf32, #tpu.memory_space<vmem>>, vector<8x1xf32>
    %178 = vector.extract_strided_slice %164 {offsets = [2, 0], sizes = [1, 384], strides = [1, 1]} : vector<3x384xf32> to vector<1x384xf32>
    %179 = vector.broadcast %177 : vector<8x1xf32> to vector<8x384xf32>
    %180 = vector.broadcast %178 : vector<1x384xf32> to vector<8x384xf32>
    %181 = arith.mulf %179, %180 : vector<8x384xf32>
    %182 = arith.addf %176, %181 : vector<8x384xf32>
    %cst = arith.constant 0.333333343 : f32
    %183 = vector.broadcast %cst : f32 to vector<8x384xf32>
    %184 = arith.maximumf %182, %183 : vector<8x384xf32>
    %cst_53 = arith.constant 3.000000e+00 : f32
    %185 = vector.broadcast %cst_53 : f32 to vector<8x384xf32>
    %186 = arith.minimumf %184, %185 : vector<8x384xf32>
    %c0_54 = arith.constant 0 : index
    %c0_55 = arith.constant 0 : index
    %c0_56 = arith.constant 0 : index
    %187 = vector.load %arg4[%c0_54, %c0_55, %c0_56] : memref<1x8x384xf32, #tpu.memory_space<vmem>>, vector<1x8x384xf32>
    %188 = vector.shape_cast %187 : vector<1x8x384xf32> to vector<8x384xf32>
    %189 = vector.shape_cast %186 : vector<8x384xf32> to vector<1x8x384xf32>
    tpu.vector_store %arg4[%c0_54, %c0_55, %c0_56], %189 {strides = array<i32>} : memref<1x8x384xf32, #tpu.memory_space<vmem>>, vector<1x8x384xf32>,
    return
  }
  func.func @transform_0(%arg0: i32) -> (i32, i32, i32) {
    %c0_i32 = arith.constant 0 : i32
    %c0_i32_0 = arith.constant 0 : i32
    %c0_i32_1 = arith.constant 0 : i32
    return %arg0, %c0_i32, %c0_i32_0 : i32, i32, i32
  }
  func.func @transform_1(%arg0: i32) -> (i32, i32) {
    %c0_i32 = arith.constant 0 : i32
    %c0_i32_0 = arith.constant 0 : i32
    %c0_i32_1 = arith.constant 0 : i32
    return %c0_i32, %c0_i32_0 : i32, i32
  }
  func.func @transform_2(%arg0: i32) -> (i32, i32) {
    %c0_i32 = arith.constant 0 : i32
    %c0_i32_0 = arith.constant 0 : i32
    %c0_i32_1 = arith.constant 0 : i32
    return %c0_i32, %c0_i32_0 : i32, i32
  }
  func.func @transform_3(%arg0: i32) -> (i32, i32, i32) {
    %c0_i32 = arith.constant 0 : i32
    %c0_i32_0 = arith.constant 0 : i32
    %c0_i32_1 = arith.constant 0 : i32
    return %arg0, %c0_i32, %c0_i32_0 : i32, i32, i32
  }
}

</mosaic_0001>

<llo_original>
// kernel: tpu_custom_call.1
$region0: #{tpu_custom_call.1}
  #allocation0 [shape = 'u32[]', space=smem, size = 0x4, offset = 0x4, fixed_abs, tag = 'smem constant byte address 0x4 - core index']
  #allocation1 [shape = 'u32[144,128]{1,0:T(1,128)}', space=vmem, size = 0x12000, scoped, tag = 'internal scratch']
  %s0 = inlined_call_operand.vmem [shape: f32[2,3,512], index: 0, kind: input, shape index: {}]
  %s1 = inlined_call_operand.vmem [shape: f32[8,27], index: 1, kind: input, shape index: {}]
  %s2 = inlined_call_operand.vmem [shape: f32[8,1], index: 2, kind: input, shape index: {}]
  %s3 = inlined_call_operand.hbm [shape: f32[2,8,384], index: 3, kind: output, shape index: {}]
  %s4 = sld [smem:[#allocation0]]
  $region45: #{tpu_custom_call.1} parent=0
    _
  %s6 = ssub.s32 1, %s4
  %s7 = scalar_select 0, %s6, %s4
  $region1: #{tpu_custom_call.1} parent=0
    #allocation2 [shape = 'u8[24576]{0}', space=vmem, size = 0x6000, scoped, tag = 'output window, operand 0']
    #allocation3 [shape = 's32[2]{0}', space=sflag, size = 0x8, scoped, tag = 'scoped memory for tpu_custom_call.1']
    %8 = vsyncpa [#allocation3], 0
    %s9 = scalar_lea.sflag [#allocation3], 1
    %10 = vsyncpa %s9, 0
    loop: start=0, step=1, limit=4
    $region2: #{tpu_custom_call.1} parent=1 // loop_pre_header
      _
    $region3: #{tpu_custom_call.1} parent=1 // loop_header
      %s12 = sphi 0, %s16
      %p13 = scmp.ge.s32.totalorder %s12, 4
      %s22 = sphi 0, %s24
      %s25 = sphi 0, %s22
      %s26 = sphi 0, %s25
      %s42 = sphi 0, %s26
      %s46 = sphi 0, %s46
      %s48 = sphi 0, %s46
      %s49 = sphi 0, %s48
      %s63 = sphi 0, %s49
      %s67 = sphi 0, %s67
      %s69 = sphi 0, %s67
      %s70 = sphi 0, %s69
      %s84 = sphi 0, %s70
      %s90 = sphi 0, %s92
      %s93 = sphi 0, %s90
      %s94 = sphi 0, %s93
      %s110 = sphi 0, %s94
    $region4: #{tpu_custom_call.1} parent=1 // loop_header_branch
      %15 = sbr.rel (%p13) target = $region8
    $region5: #{tpu_custom_call.1} parent=1 // loop_body
      %s17 = ssub.s32 %s12, 1
      %s18 = ssub.s32 %s12, 2
      %s19 = sadd.s32 %s12, 1
      %s20 = ssub.s32 %s12, %s19
      %p21 = scmp.eq.s32.totalorder %s20, 0
      %s23 = sadd.s32 %s22, 1
      %s24 = scalar_select %p21, %s22, %s23
      %p27 = pneg %p21
      %p28 = scmp.eq.s32.totalorder %s12, 1
      %p29 = por %p27, %p28
      %p30 = scmp.ne.s32.totalorder %s22, %s25
      %p31 = scmp.eq.s32.totalorder %s12, 0
      %p32 = por %p30, %p31
      %p33 = scmp.ne.s32.totalorder %s22, %s25
      %p34 = scmp.eq.s32.totalorder %s17, 1
      %p35 = por %p33, %p34
      %p36 = scmp.ne.s32.totalorder %s25, %s26
      %p37 = scmp.eq.s32.totalorder %s17, 0
      %p38 = por %p36, %p37
      %p39 = scmp.ne.s32.totalorder %s25, %s26
      %p40 = scmp.eq.s32.totalorder %s18, 1
      %p41 = por %p39, %p40
      %p43 = scmp.ne.s32.totalorder %s26, %s42
      %p44 = scmp.eq.s32.totalorder %s18, 0
      %p45 = por %p43, %p44
      %s47 = sadd.s32 %s46, 1
      %p50 = scmp.eq.s32.totalorder %s12, 1
      %p51 = scmp.ne.s32.totalorder %s46, %s48
      %p52 = scmp.eq.s32.totalorder %s12, 0
      %p53 = por %p51, %p52
      %p54 = scmp.ne.s32.totalorder %s46, %s48
      %p55 = scmp.eq.s32.totalorder %s17, 1
      %p56 = por %p54, %p55
      %p57 = scmp.ne.s32.totalorder %s48, %s49
      %p58 = scmp.eq.s32.totalorder %s17, 0
      %p59 = por %p57, %p58
      %p60 = scmp.ne.s32.totalorder %s48, %s49
      %p61 = scmp.eq.s32.totalorder %s18, 1
      %p62 = por %p60, %p61
      %p64 = scmp.ne.s32.totalorder %s49, %s63
      %p65 = scmp.eq.s32.totalorder %s18, 0
      %p66 = por %p64, %p65
      %s68 = sadd.s32 %s67, 1
      %p71 = scmp.eq.s32.totalorder %s12, 1
      %p72 = scmp.ne.s32.totalorder %s67, %s69
      %p73 = scmp.eq.s32.totalorder %s12, 0
      %p74 = por %p72, %p73
      %p75 = scmp.ne.s32.totalorder %s67, %s69
      %p76 = scmp.eq.s32.totalorder %s17, 1
      %p77 = por %p75, %p76
      %p78 = scmp.ne.s32.totalorder %s69, %s70
      %p79 = scmp.eq.s32.totalorder %s17, 0
      %p80 = por %p78, %p79
      %p81 = scmp.ne.s32.totalorder %s69, %s70
      %p82 = scmp.eq.s32.totalorder %s18, 1
      %p83 = por %p81, %p82
      %p85 = scmp.ne.s32.totalorder %s70, %s84
      %p86 = scmp.eq.s32.totalorder %s18, 0
      %p87 = por %p85, %p86
      %s88 = ssub.s32 %s12, %s19
      %p89 = scmp.eq.s32.totalorder %s88, 0
      %s91 = sadd.s32 %s90, 1
      %s92 = scalar_select %p89, %s90, %s91
      %p95 = pneg %p89
      %p96 = scmp.eq.s32.totalorder %s12, 1
      %p97 = por %p95, %p96
      %p98 = scmp.ne.s32.totalorder %s90, %s93
      %p99 = scmp.eq.s32.totalorder %s12, 0
      %p100 = por %p98, %p99
      %p101 = scmp.ne.s32.totalorder %s90, %s93
      %p102 = scmp.eq.s32.totalorder %s17, 1
      %p103 = por %p101, %p102
      %p104 = scmp.ne.s32.totalorder %s93, %s94
      %p105 = scmp.eq.s32.totalorder %s17, 0
      %p106 = por %p104, %p105
      %p107 = scmp.ne.s32.totalorder %s93, %s94
      %p108 = scmp.eq.s32.totalorder %s18, 1
      %p109 = por %p107, %p108
      %p111 = scmp.ne.s32.totalorder %s94, %s110
      %p112 = scmp.eq.s32.totalorder %s18, 0
      %p113 = por %p111, %p112
      %p114 = scmp.le.s32.totalorder 1, %s12
      %p115 = scmp.lt.s32.totalorder %s12, 3
      %p116 = pnand %p114, %p115
      %p117 = pneg %p116
      // Predicated region
      $region9: #{tpu_custom_call.1} parent=5 // pred_check
        _
      $region10: #{tpu_custom_call.1} parent=5 // pred_check_branch
        %119 = sbr.rel (%p116) target = $region12
      $region11: #{tpu_custom_call.1} parent=5 // pred_region
        %s120 = ssub.s32 %s12, 1
        // Predicated region
        $region13: #{tpu_custom_call.1} parent=11 // pred_check
          %p121 = pneg %p59
        $region14: #{tpu_custom_call.1} parent=11 // pred_check_branch
          %123 = sbr.rel (%p121) target = $region16
        $region15: #{tpu_custom_call.1} parent=11 // pred_region
          _
        $region16: #{tpu_custom_call.1} parent=11 // pred_fallthru
          _
        // Predicated region
        $region17: #{tpu_custom_call.1} parent=11 // pred_check
          %p124 = pneg %p80
        $region18: #{tpu_custom_call.1} parent=11 // pred_check_branch
          %126 = sbr.rel (%p124) target = $region20
        $region19: #{tpu_custom_call.1} parent=11 // pred_region
          _
        $region20: #{tpu_custom_call.1} parent=11 // pred_fallthru
          _
      $region12: #{tpu_custom_call.1} parent=5 // pred_fallthru
        _
      %p127 = scmp.lt.s32.totalorder %s12, 2
      // Predicated region
      $region21: #{tpu_custom_call.1} parent=5 // pred_check
        %p128 = pneg %p127
      $region22: #{tpu_custom_call.1} parent=5 // pred_check_branch
        %130 = sbr.rel (%p128) target = $region24
      $region23: #{tpu_custom_call.1} parent=5 // pred_region
        // Predicated region
        $region25: #{tpu_custom_call.1} parent=23 // pred_check
          %p131 = pneg %p32
        $region26: #{tpu_custom_call.1} parent=23 // pred_check_branch
          %133 = sbr.rel (%p131) target = $region28
        $region27: #{tpu_custom_call.1} parent=23 // pred_region
          %p134 = scmp.lt.s32.totalorder %s12, 1
          %s135 = scalar_select %p134, %s12, 1
          %s136 = smul.addr %s135, 4
          %s137 = smul.addr %s136, 4
          %s138 = scalar_lea.vmem %s0, %s137
        $region28: #{tpu_custom_call.1} parent=23 // pred_fallthru
          _
      $region24: #{tpu_custom_call.1} parent=5 // pred_fallthru
        _
      %p139 = scmp.le.s32.totalorder 1, %s12
      %p140 = scmp.lt.s32.totalorder %s12, 3
      %p141 = pnand %p139, %p140
      %p142 = pneg %p141
      // Predicated region
      $region29: #{tpu_custom_call.1} parent=5 // pred_check
        _
      $region30: #{tpu_custom_call.1} parent=5 // pred_check_branch
        %144 = sbr.rel (%p141) target = $region32
      $region31: #{tpu_custom_call.1} parent=5 // pred_region
        %s145 = ssub.s32 %s12, 1
        %p146 = scmp.lt.s32.totalorder %s17, 1
        %s147 = scalar_select %p146, %s17, 1
        %s148 = smul.addr %s147, 4
        %s149 = smul.addr %s148, 4
        %s150 = scalar_lea.vmem %s0, %s149
        %p151 = pneg %p38
        %p152 = pneg %p35
        %p153 = pneg %p59
        %p154 = pneg %p56
        %p155 = pneg %p80
        %p156 = pneg %p77
        %p157 = pneg %p106
        %p158 = pneg %p103
        %s159 = sand.u32 %s93, 1
        %s160 = scalar_lea.sflag [#allocation3], %s159
        %s161 = sand.u32 %s93, 1
        %s162 = smul.addr %s161, 24
        %s163 = scalar_lea.vmem [#allocation2], %s162
        %p164 = scmp.lt.s32.totalorder %s17, 1
        %s165 = scalar_select %p164, %s17, 1
        %s166 = smul.addr %s165, 4
        %s167 = smul.addr %s166, 4
        %s168 = scalar_lea.vmem %s0, %s167
        %v169 = vld [vmem:[%s2] sm:$0xff]
        %171 = vset.pattern.permute.xlu0 0
        %172 = vperm.xlu0 %171, %v169
        %v173 = vpop.permute.xlu0 %172
        %v175 = vld [vmem:[%s168] sm:$0x77]
        %v176 = vld [vmem:[%s168 + $0x8] sm:$0x7]
        %v177 = vld [vmem:[%s1] sm:$0xff]
        %179 = vset.pattern.permute.xlu0 0
        %180 = vperm.xlu0 %179, %v177
        %v181 = vpop.permute.xlu0 %180
        %v185 = vlaneseq
        %v186 = vshrl.u32 %v185, 7
        %v187 = vsub.s32 0, %v186
        %v188 = vrot.slane %v175, %v187
        %v189 = vlaneseq
        %v190 = vshrl.u32 %v189, 7
        %v191 = vsub.s32 4, %v190
        %v192 = vrot.slane %v175, %v191
        %v193 = vlaneseq
        %v194 = vshrl.u32 %v193, 7
        %v195 = vsub.s32 0, %v194
        %v196 = vrot.slane %v176, %v195
        %v200 = vlaneseq
        %v201 = vshrl.u32 %v200, 7
        %v202 = vsub.s32 0, %v201
        %v203 = vrot.slane %v188, %v202
        %v204 = vlaneseq
        %v205 = vshrl.u32 %v204, 7
        %v206 = vsub.s32 0, %v205
        %v207 = vrot.slane %v192, %v206
        %v208 = vlaneseq
        %v209 = vshrl.u32 %v208, 7
        %v210 = vsub.s32 0, %v209
        %v211 = vrot.slane %v196, %v210
        %v212 = vmul.f32 %v181, %v203
        %v213 = vmul.f32 %v181, %v207
        %v214 = vmul.f32 %v181, %v211
        %v215 = vadd.f32 %v173, %v212
        %v216 = vadd.f32 %v173, %v213
        %v217 = vadd.f32 %v173, %v214
        %218 = vset.pattern.permute.xlu0 1
        %219 = vperm.xlu0 %218, %v177
        %v220 = vpop.permute.xlu0 %219
        %v222 = vlaneseq
        %v223 = vshrl.u32 %v222, 7
        %v224 = vsub.s32 1, %v223
        %v225 = vrot.slane %v175, %v224
        %v226 = vlaneseq
        %v227 = vshrl.u32 %v226, 7
        %v228 = vsub.s32 5, %v227
        %v229 = vrot.slane %v175, %v228
        %v230 = vlaneseq
        %v231 = vshrl.u32 %v230, 7
        %v232 = vsub.s32 1, %v231
        %v233 = vrot.slane %v176, %v232
        %v237 = vlaneseq
        %v238 = vshrl.u32 %v237, 7
        %v239 = vsub.s32 1, %v238
        %v240 = vrot.slane %v225, %v239
        %v241 = vlaneseq
        %v242 = vshrl.u32 %v241, 7
        %v243 = vsub.s32 1, %v242
        %v244 = vrot.slane %v229, %v243
        %v245 = vlaneseq
        %v246 = vshrl.u32 %v245, 7
        %v247 = vsub.s32 1, %v246
        %v248 = vrot.slane %v233, %v247
        %v249 = vmul.f32 %v220, %v240
        %v250 = vmul.f32 %v220, %v244
        %v251 = vmul.f32 %v220, %v248
        %v252 = vadd.f32 %v215, %v249
        %v253 = vadd.f32 %v216, %v250
        %v254 = vadd.f32 %v217, %v251
        %255 = vset.pattern.permute.xlu0 2
        %256 = vperm.xlu0 %255, %v177
        %v257 = vpop.permute.xlu0 %256
        %v259 = vlaneseq
        %v260 = vshrl.u32 %v259, 7
        %v261 = vsub.s32 2, %v260
        %v262 = vrot.slane %v175, %v261
        %v263 = vlaneseq
        %v264 = vshrl.u32 %v263, 7
        %v265 = vsub.s32 6, %v264
        %v266 = vrot.slane %v175, %v265
        %v267 = vlaneseq
        %v268 = vshrl.u32 %v267, 7
        %v269 = vsub.s32 2, %v268
        %v270 = vrot.slane %v176, %v269
        %v274 = vlaneseq
        %v275 = vshrl.u32 %v274, 7
        %v276 = vsub.s32 2, %v275
        %v277 = vrot.slane %v262, %v276
        %v278 = vlaneseq
        %v279 = vshrl.u32 %v278, 7
        %v280 = vsub.s32 2, %v279
        %v281 = vrot.slane %v266, %v280
        %v282 = vlaneseq
        %v283 = vshrl.u32 %v282, 7
        %v284 = vsub.s32 2, %v283
        %v285 = vrot.slane %v270, %v284
        %v286 = vmul.f32 %v257, %v277
        %v287 = vmul.f32 %v257, %v281
        %v288 = vmul.f32 %v257, %v285
        %v289 = vadd.f32 %v252, %v286
        %v290 = vadd.f32 %v253, %v287
        %v291 = vadd.f32 %v254, %v288
        %v292 = vld [vmem:[%s168] sm:$0x77]
        %v293 = vld [vmem:[%s168 + $0x8] sm:$0x77]
        %294 = vset.pattern.permute.xlu0 3
        %295 = vperm.xlu0 %294, %v177
        %v296 = vpop.permute.xlu0 %295
        %v300 = vlaneseq
        %v301 = vshrl.u32 %v300, 7
        %v302 = vsub.s32 0, %v301
        %v303 = vrot.slane %v292, %v302
        %v304 = vlaneseq
        %v305 = vshrl.u32 %v304, 7
        %v306 = vsub.s32 4, %v305
        %v307 = vrot.slane %v292, %v306
        %v308 = vlaneseq
        %v309 = vshrl.u32 %v308, 7
        %v310 = vsub.s32 0, %v309
        %v311 = vrot.slane %v293, %v310
        %v312 = vlaneseq
        %v313 = vshrl.u32 %v312, 7
        %v314 = vsub.s32 4, %v313
        %v315 = vrot.slane %v293, %v314
        %v320 = vlaneseq
        %v321 = vshrl.u32 %v320, 7
        %v322 = vsub.s32 0, %v321
        %v323 = vrot.slane %v303, %v322
        %v324 = vlaneseq
        %v325 = vshrl.u32 %v324, 7
        %v326 = vsub.s32 0, %v325
        %v327 = vrot.slane %v307, %v326
        %v328 = vlaneseq
        %v329 = vshrl.u32 %v328, 7
        %v330 = vsub.s32 0, %v329
        %v331 = vrot.slane %v311, %v330
        %v332 = vlaneseq
        %v333 = vshrl.u32 %v332, 7
        %v334 = vsub.s32 0, %v333
        %v335 = vrot.slane %v315, %v334
        %v336 = vmul.f32 %v296, %v323
        %v337 = vmul.f32 %v296, %v327
        %v338 = vmul.f32 %v296, %v331
        %v339 = vmul.f32 %v296, %v335
        %344 = vrot.lane.b32.xlu0 %v336, 127
        %v345 = vpop.permute.xlu0 %344
        %346 = vrot.lane.b32.xlu0 %v337, 127
        %v347 = vpop.permute.xlu0 %346
        %348 = vrot.lane.b32.xlu0 %v338, 127
        %v349 = vpop.permute.xlu0 %348
        %350 = vrot.lane.b32.xlu0 %v339, 127
        %v351 = vpop.permute.xlu0 %350
        %vm352 = vcmask 1039360
        %v353 = vsel %vm352, %v345, %v347
        %v354 = vsel %vm352, %v347, %v349
        %v355 = vsel %vm352, %v349, %v351
        %v359 = vadd.f32 %v289, %v353
        %v360 = vadd.f32 %v290, %v354
        %v361 = vadd.f32 %v291, %v355
        %362 = vset.pattern.permute.xlu0 4
        %363 = vperm.xlu0 %362, %v177
        %v364 = vpop.permute.xlu0 %363
        %v366 = vlaneseq
        %v367 = vshrl.u32 %v366, 7
        %v368 = vsub.s32 1, %v367
        %v369 = vrot.slane %v292, %v368
        %v370 = vlaneseq
        %v371 = vshrl.u32 %v370, 7
        %v372 = vsub.s32 5, %v371
        %v373 = vrot.slane %v292, %v372
        %v374 = vlaneseq
        %v375 = vshrl.u32 %v374, 7
        %v376 = vsub.s32 1, %v375
        %v377 = vrot.slane %v293, %v376
        %v378 = vlaneseq
        %v379 = vshrl.u32 %v378, 7
        %v380 = vsub.s32 5, %v379
        %v381 = vrot.slane %v293, %v380
        %v386 = vlaneseq
        %v387 = vshrl.u32 %v386, 7
        %v388 = vsub.s32 1, %v387
        %v389 = vrot.slane %v369, %v388
        %v390 = vlaneseq
        %v391 = vshrl.u32 %v390, 7
        %v392 = vsub.s32 1, %v391
        %v393 = vrot.slane %v373, %v392
        %v394 = vlaneseq
        %v395 = vshrl.u32 %v394, 7
        %v396 = vsub.s32 1, %v395
        %v397 = vrot.slane %v377, %v396
        %v398 = vlaneseq
        %v399 = vshrl.u32 %v398, 7
        %v400 = vsub.s32 1, %v399
        %v401 = vrot.slane %v381, %v400
        %v402 = vmul.f32 %v364, %v389
        %v403 = vmul.f32 %v364, %v393
        %v404 = vmul.f32 %v364, %v397
        %v405 = vmul.f32 %v364, %v401
        %410 = vrot.lane.b32.xlu0 %v402, 127
        %v411 = vpop.permute.xlu0 %410
        %412 = vrot.lane.b32.xlu0 %v403, 127
        %v413 = vpop.permute.xlu0 %412
        %414 = vrot.lane.b32.xlu0 %v404, 127
        %v415 = vpop.permute.xlu0 %414
        %416 = vrot.lane.b32.xlu0 %v405, 127
        %v417 = vpop.permute.xlu0 %416
        %v418 = vsel %vm352, %v411, %v413
        %v419 = vsel %vm352, %v413, %v415
        %v420 = vsel %vm352, %v415, %v417
        %v424 = vadd.f32 %v359, %v418
        %v425 = vadd.f32 %v360, %v419
        %v426 = vadd.f32 %v361, %v420
        %427 = vset.pattern.permute.xlu0 5
        %428 = vperm.xlu0 %427, %v177
        %v429 = vpop.permute.xlu0 %428
        %v431 = vlaneseq
        %v432 = vshrl.u32 %v431, 7
        %v433 = vsub.s32 2, %v432
        %v434 = vrot.slane %v292, %v433
        %v435 = vlaneseq
        %v436 = vshrl.u32 %v435, 7
        %v437 = vsub.s32 6, %v436
        %v438 = vrot.slane %v292, %v437
        %v439 = vlaneseq
        %v440 = vshrl.u32 %v439, 7
        %v441 = vsub.s32 2, %v440
        %v442 = vrot.slane %v293, %v441
        %v443 = vlaneseq
        %v444 = vshrl.u32 %v443, 7
        %v445 = vsub.s32 6, %v444
        %v446 = vrot.slane %v293, %v445
        %v451 = vlaneseq
        %v452 = vshrl.u32 %v451, 7
        %v453 = vsub.s32 2, %v452
        %v454 = vrot.slane %v434, %v453
        %v455 = vlaneseq
        %v456 = vshrl.u32 %v455, 7
        %v457 = vsub.s32 2, %v456
        %v458 = vrot.slane %v438, %v457
        %v459 = vlaneseq
        %v460 = vshrl.u32 %v459, 7
        %v461 = vsub.s32 2, %v460
        %v462 = vrot.slane %v442, %v461
        %v463 = vlaneseq
        %v464 = vshrl.u32 %v463, 7
        %v465 = vsub.s32 2, %v464
        %v466 = vrot.slane %v446, %v465
        %v467 = vmul.f32 %v429, %v454
        %v468 = vmul.f32 %v429, %v458
        %v469 = vmul.f32 %v429, %v462
        %v470 = vmul.f32 %v429, %v466
        %475 = vrot.lane.b32.xlu0 %v467, 127
        %v476 = vpop.permute.xlu0 %475
        %477 = vrot.lane.b32.xlu0 %v468, 127
        %v478 = vpop.permute.xlu0 %477
        %479 = vrot.lane.b32.xlu0 %v469, 127
        %v480 = vpop.permute.xlu0 %479
        %481 = vrot.lane.b32.xlu0 %v470, 127
        %v482 = vpop.permute.xlu0 %481
        %v483 = vsel %vm352, %v476, %v478
        %v484 = vsel %vm352, %v478, %v480
        %v485 = vsel %vm352, %v480, %v482
        %v489 = vadd.f32 %v424, %v483
        %v490 = vadd.f32 %v425, %v484
        %v491 = vadd.f32 %v426, %v485
        %492 = vset.pattern.permute.xlu0 6
        %493 = vperm.xlu0 %492, %v177
        %v494 = vpop.permute.xlu0 %493
        %v496 = vmul.f32 %v494, %v323
        %v497 = vmul.f32 %v494, %v327
        %v498 = vmul.f32 %v494, %v331
        %v499 = vmul.f32 %v494, %v335
        %504 = vrot.lane.b32.xlu0 %v496, 126
        %v505 = vpop.permute.xlu0 %504
        %506 = vrot.lane.b32.xlu0 %v497, 126
        %v507 = vpop.permute.xlu0 %506
        %508 = vrot.lane.b32.xlu0 %v498, 126
        %v509 = vpop.permute.xlu0 %508
        %510 = vrot.lane.b32.xlu0 %v499, 126
        %v511 = vpop.permute.xlu0 %510
        %vm512 = vcmask 1031168
        %v513 = vsel %vm512, %v505, %v507
        %v514 = vsel %vm512, %v507, %v509
        %v515 = vsel %vm512, %v509, %v511
        %v519 = vadd.f32 %v489, %v513
        %v520 = vadd.f32 %v490, %v514
        %v521 = vadd.f32 %v491, %v515
        %522 = vset.pattern.permute.xlu0 7
        %523 = vperm.xlu0 %522, %v177
        %v524 = vpop.permute.xlu0 %523
        %v526 = vmul.f32 %v524, %v389
        %v527 = vmul.f32 %v524, %v393
        %v528 = vmul.f32 %v524, %v397
        %v529 = vmul.f32 %v524, %v401
        %534 = vrot.lane.b32.xlu0 %v526, 126
        %v535 = vpop.permute.xlu0 %534
        %536 = vrot.lane.b32.xlu0 %v527, 126
        %v537 = vpop.permute.xlu0 %536
        %538 = vrot.lane.b32.xlu0 %v528, 126
        %v539 = vpop.permute.xlu0 %538
        %540 = vrot.lane.b32.xlu0 %v529, 126
        %v541 = vpop.permute.xlu0 %540
        %v542 = vsel %vm512, %v535, %v537
        %v543 = vsel %vm512, %v537, %v539
        %v544 = vsel %vm512, %v539, %v541
        %v548 = vadd.f32 %v519, %v542
        %v549 = vadd.f32 %v520, %v543
        %v550 = vadd.f32 %v521, %v544
        %551 = vset.pattern.permute.xlu0 8
        %552 = vperm.xlu0 %551, %v177
        %v553 = vpop.permute.xlu0 %552
        %v555 = vmul.f32 %v553, %v454
        %v556 = vmul.f32 %v553, %v458
        %v557 = vmul.f32 %v553, %v462
        %v558 = vmul.f32 %v553, %v466
        %563 = vrot.lane.b32.xlu0 %v555, 126
        %v564 = vpop.permute.xlu0 %563
        %565 = vrot.lane.b32.xlu0 %v556, 126
        %v566 = vpop.permute.xlu0 %565
        %567 = vrot.lane.b32.xlu0 %v557, 126
        %v568 = vpop.permute.xlu0 %567
        %569 = vrot.lane.b32.xlu0 %v558, 126
        %v570 = vpop.permute.xlu0 %569
        %v571 = vsel %vm512, %v564, %v566
        %v572 = vsel %vm512, %v566, %v568
        %v573 = vsel %vm512, %v568, %v570
        %v577 = vadd.f32 %v548, %v571
        %v578 = vadd.f32 %v549, %v572
        %v579 = vadd.f32 %v550, %v573
        %580 = vset.pattern.permute.xlu0 9
        %581 = vperm.xlu0 %580, %v177
        %v582 = vpop.permute.xlu0 %581
        %v584 = vmul.f32 %v582, %v323
        %v585 = vmul.f32 %v582, %v327
        %v586 = vmul.f32 %v582, %v331
        %v587 = vmul.f32 %v582, %v335
        %592 = vrot.lane.b32.xlu0 %v584, 110
        %v593 = vpop.permute.xlu0 %592
        %594 = vrot.lane.b32.xlu0 %v585, 110
        %v595 = vpop.permute.xlu0 %594
        %596 = vrot.lane.b32.xlu0 %v586, 110
        %v597 = vpop.permute.xlu0 %596
        %598 = vrot.lane.b32.xlu0 %v587, 110
        %v599 = vpop.permute.xlu0 %598
        %vm600 = vcmask 900096
        %v601 = vsel %vm600, %v593, %v595
        %v602 = vsel %vm600, %v595, %v597
        %v603 = vsel %vm600, %v597, %v599
        %v607 = vadd.f32 %v577, %v601
        %v608 = vadd.f32 %v578, %v602
        %v609 = vadd.f32 %v579, %v603
        %610 = vset.pattern.permute.xlu0 10
        %611 = vperm.xlu0 %610, %v177
        %v612 = vpop.permute.xlu0 %611
        %v614 = vmul.f32 %v612, %v389
        %v615 = vmul.f32 %v612, %v393
        %v616 = vmul.f32 %v612, %v397
        %v617 = vmul.f32 %v612, %v401
        %622 = vrot.lane.b32.xlu0 %v614, 110
        %v623 = vpop.permute.xlu0 %622
        %624 = vrot.lane.b32.xlu0 %v615, 110
        %v625 = vpop.permute.xlu0 %624
        %626 = vrot.lane.b32.xlu0 %v616, 110
        %v627 = vpop.permute.xlu0 %626
        %628 = vrot.lane.b32.xlu0 %v617, 110
        %v629 = vpop.permute.xlu0 %628
        %v630 = vsel %vm600, %v623, %v625
        %v631 = vsel %vm600, %v625, %v627
        %v632 = vsel %vm600, %v627, %v629
        %v636 = vadd.f32 %v607, %v630
        %v637 = vadd.f32 %v608, %v631
        %v638 = vadd.f32 %v609, %v632
        %639 = vset.pattern.permute.xlu0 11
        %640 = vperm.xlu0 %639, %v177
        %v641 = vpop.permute.xlu0 %640
        %v643 = vmul.f32 %v641, %v454
        %v644 = vmul.f32 %v641, %v458
        %v645 = vmul.f32 %v641, %v462
        %v646 = vmul.f32 %v641, %v466
        %651 = vrot.lane.b32.xlu0 %v643, 110
        %v652 = vpop.permute.xlu0 %651
        %653 = vrot.lane.b32.xlu0 %v644, 110
        %v654 = vpop.permute.xlu0 %653
        %655 = vrot.lane.b32.xlu0 %v645, 110
        %v656 = vpop.permute.xlu0 %655
        %657 = vrot.lane.b32.xlu0 %v646, 110
        %v658 = vpop.permute.xlu0 %657
        %v659 = vsel %vm600, %v652, %v654
        %v660 = vsel %vm600, %v654, %v656
        %v661 = vsel %vm600, %v656, %v658
        %v665 = vadd.f32 %v636, %v659
        %v666 = vadd.f32 %v637, %v660
        %v667 = vadd.f32 %v638, %v661
        %668 = vset.pattern.permute.xlu0 12
        %669 = vperm.xlu0 %668, %v177
        %v670 = vpop.permute.xlu0 %669
        %v672 = vmul.f32 %v670, %v323
        %v673 = vmul.f32 %v670, %v327
        %v674 = vmul.f32 %v670, %v331
        %v675 = vmul.f32 %v670, %v335
        %680 = vrot.lane.b32.xlu0 %v672, 109
        %v681 = vpop.permute.xlu0 %680
        %682 = vrot.lane.b32.xlu0 %v673, 109
        %v683 = vpop.permute.xlu0 %682
        %684 = vrot.lane.b32.xlu0 %v674, 109
        %v685 = vpop.permute.xlu0 %684
        %686 = vrot.lane.b32.xlu0 %v675, 109
        %v687 = vpop.permute.xlu0 %686
        %vm688 = vcmask 891904
        %v689 = vsel %vm688, %v681, %v683
        %v690 = vsel %vm688, %v683, %v685
        %v691 = vsel %vm688, %v685, %v687
        %v695 = vadd.f32 %v665, %v689
        %v696 = vadd.f32 %v666, %v690
        %v697 = vadd.f32 %v667, %v691
        %698 = vset.pattern.permute.xlu0 13
        %699 = vperm.xlu0 %698, %v177
        %v700 = vpop.permute.xlu0 %699
        %v702 = vmul.f32 %v700, %v389
        %v703 = vmul.f32 %v700, %v393
        %v704 = vmul.f32 %v700, %v397
        %v705 = vmul.f32 %v700, %v401
        %710 = vrot.lane.b32.xlu0 %v702, 109
        %v711 = vpop.permute.xlu0 %710
        %712 = vrot.lane.b32.xlu0 %v703, 109
        %v713 = vpop.permute.xlu0 %712
        %714 = vrot.lane.b32.xlu0 %v704, 109
        %v715 = vpop.permute.xlu0 %714
        %716 = vrot.lane.b32.xlu0 %v705, 109
        %v717 = vpop.permute.xlu0 %716
        %v718 = vsel %vm688, %v711, %v713
        %v719 = vsel %vm688, %v713, %v715
        %v720 = vsel %vm688, %v715, %v717
        %v724 = vadd.f32 %v695, %v718
        %v725 = vadd.f32 %v696, %v719
        %v726 = vadd.f32 %v697, %v720
        %727 = vset.pattern.permute.xlu0 14
        %728 = vperm.xlu0 %727, %v177
        %v729 = vpop.permute.xlu0 %728
        %v731 = vmul.f32 %v729, %v454
        %v732 = vmul.f32 %v729, %v458
        %v733 = vmul.f32 %v729, %v462
        %v734 = vmul.f32 %v729, %v466
        %739 = vrot.lane.b32.xlu0 %v731, 109
        %v740 = vpop.permute.xlu0 %739
        %741 = vrot.lane.b32.xlu0 %v732, 109
        %v742 = vpop.permute.xlu0 %741
        %743 = vrot.lane.b32.xlu0 %v733, 109
        %v744 = vpop.permute.xlu0 %743
        %745 = vrot.lane.b32.xlu0 %v734, 109
        %v746 = vpop.permute.xlu0 %745
        %v747 = vsel %vm688, %v740, %v742
        %v748 = vsel %vm688, %v742, %v744
        %v749 = vsel %vm688, %v744, %v746
        %v753 = vadd.f32 %v724, %v747
        %v754 = vadd.f32 %v725, %v748
        %v755 = vadd.f32 %v726, %v749
        %756 = vset.pattern.permute.xlu0 15
        %757 = vperm.xlu0 %756, %v177
        %v758 = vpop.permute.xlu0 %757
        %v760 = vmul.f32 %v758, %v323
        %v761 = vmul.f32 %v758, %v327
        %v762 = vmul.f32 %v758, %v331
        %v763 = vmul.f32 %v758, %v335
        %768 = vrot.lane.b32.xlu0 %v760, 108
        %v769 = vpop.permute.xlu0 %768
        %770 = vrot.lane.b32.xlu0 %v761, 108
        %v771 = vpop.permute.xlu0 %770
        %772 = vrot.lane.b32.xlu0 %v762, 108
        %v773 = vpop.permute.xlu0 %772
        %774 = vrot.lane.b32.xlu0 %v763, 108
        %v775 = vpop.permute.xlu0 %774
        %vm776 = vcmask 883712
        %v777 = vsel %vm776, %v769, %v771
        %v778 = vsel %vm776, %v771, %v773
        %v779 = vsel %vm776, %v773, %v775
        %v783 = vadd.f32 %v753, %v777
        %v784 = vadd.f32 %v754, %v778
        %v785 = vadd.f32 %v755, %v779
        %786 = vset.pattern.permute.xlu0 16
        %787 = vperm.xlu0 %786, %v177
        %v788 = vpop.permute.xlu0 %787
        %v790 = vmul.f32 %v788, %v389
        %v791 = vmul.f32 %v788, %v393
        %v792 = vmul.f32 %v788, %v397
        %v793 = vmul.f32 %v788, %v401
        %798 = vrot.lane.b32.xlu0 %v790, 108
        %v799 = vpop.permute.xlu0 %798
        %800 = vrot.lane.b32.xlu0 %v791, 108
        %v801 = vpop.permute.xlu0 %800
        %802 = vrot.lane.b32.xlu0 %v792, 108
        %v803 = vpop.permute.xlu0 %802
        %804 = vrot.lane.b32.xlu0 %v793, 108
        %v805 = vpop.permute.xlu0 %804
        %v806 = vsel %vm776, %v799, %v801
        %v807 = vsel %vm776, %v801, %v803
        %v808 = vsel %vm776, %v803, %v805
        %v812 = vadd.f32 %v783, %v806
        %v813 = vadd.f32 %v784, %v807
        %v814 = vadd.f32 %v785, %v808
        %815 = vset.pattern.permute.xlu0 17
        %816 = vperm.xlu0 %815, %v177
        %v817 = vpop.permute.xlu0 %816
        %v819 = vmul.f32 %v817, %v454
        %v820 = vmul.f32 %v817, %v458
        %v821 = vmul.f32 %v817, %v462
        %v822 = vmul.f32 %v817, %v466
        %827 = vrot.lane.b32.xlu0 %v819, 108
        %v828 = vpop.permute.xlu0 %827
        %829 = vrot.lane.b32.xlu0 %v820, 108
        %v830 = vpop.permute.xlu0 %829
        %831 = vrot.lane.b32.xlu0 %v821, 108
        %v832 = vpop.permute.xlu0 %831
        %833 = vrot.lane.b32.xlu0 %v822, 108
        %v834 = vpop.permute.xlu0 %833
        %v835 = vsel %vm776, %v828, %v830
        %v836 = vsel %vm776, %v830, %v832
        %v837 = vsel %vm776, %v832, %v834
        %v841 = vadd.f32 %v812, %v835
        %v842 = vadd.f32 %v813, %v836
        %v843 = vadd.f32 %v814, %v837
        %844 = vset.pattern.permute.xlu0 18
        %845 = vperm.xlu0 %844, %v177
        %v846 = vpop.permute.xlu0 %845
        %v848 = vmul.f32 %v846, %v323
        %v849 = vmul.f32 %v846, %v327
        %v850 = vmul.f32 %v846, %v331
        %v851 = vmul.f32 %v846, %v335
        %856 = vrot.lane.b32.xlu0 %v848, 92
        %v857 = vpop.permute.xlu0 %856
        %858 = vrot.lane.b32.xlu0 %v849, 92
        %v859 = vpop.permute.xlu0 %858
        %860 = vrot.lane.b32.xlu0 %v850, 92
        %v861 = vpop.permute.xlu0 %860
        %862 = vrot.lane.b32.xlu0 %v851, 92
        %v863 = vpop.permute.xlu0 %862
        %vm864 = vcmask 752640
        %v865 = vsel %vm864, %v857, %v859
        %v866 = vsel %vm864, %v859, %v861
        %v867 = vsel %vm864, %v861, %v863
        %v871 = vadd.f32 %v841, %v865
        %v872 = vadd.f32 %v842, %v866
        %v873 = vadd.f32 %v843, %v867
        %874 = vset.pattern.permute.xlu0 19
        %875 = vperm.xlu0 %874, %v177
        %v876 = vpop.permute.xlu0 %875
        %v878 = vmul.f32 %v876, %v389
        %v879 = vmul.f32 %v876, %v393
        %v880 = vmul.f32 %v876, %v397
        %v881 = vmul.f32 %v876, %v401
        %886 = vrot.lane.b32.xlu0 %v878, 92
        %v887 = vpop.permute.xlu0 %886
        %888 = vrot.lane.b32.xlu0 %v879, 92
        %v889 = vpop.permute.xlu0 %888
        %890 = vrot.lane.b32.xlu0 %v880, 92
        %v891 = vpop.permute.xlu0 %890
        %892 = vrot.lane.b32.xlu0 %v881, 92
        %v893 = vpop.permute.xlu0 %892
        %v894 = vsel %vm864, %v887, %v889
        %v895 = vsel %vm864, %v889, %v891
        %v896 = vsel %vm864, %v891, %v893
        %v900 = vadd.f32 %v871, %v894
        %v901 = vadd.f32 %v872, %v895
        %v902 = vadd.f32 %v873, %v896
        %903 = vset.pattern.permute.xlu0 20
        %904 = vperm.xlu0 %903, %v177
        %v905 = vpop.permute.xlu0 %904
        %v907 = vmul.f32 %v905, %v454
        %v908 = vmul.f32 %v905, %v458
        %v909 = vmul.f32 %v905, %v462
        %v910 = vmul.f32 %v905, %v466
        %915 = vrot.lane.b32.xlu0 %v907, 92
        %v916 = vpop.permute.xlu0 %915
        %917 = vrot.lane.b32.xlu0 %v908, 92
        %v918 = vpop.permute.xlu0 %917
        %919 = vrot.lane.b32.xlu0 %v909, 92
        %v920 = vpop.permute.xlu0 %919
        %921 = vrot.lane.b32.xlu0 %v910, 92
        %v922 = vpop.permute.xlu0 %921
        %v923 = vsel %vm864, %v916, %v918
        %v924 = vsel %vm864, %v918, %v920
        %v925 = vsel %vm864, %v920, %v922
        %v929 = vadd.f32 %v900, %v923
        %v930 = vadd.f32 %v901, %v924
        %v931 = vadd.f32 %v902, %v925
        %932 = vset.pattern.permute.xlu0 21
        %933 = vperm.xlu0 %932, %v177
        %v934 = vpop.permute.xlu0 %933
        %v936 = vmul.f32 %v934, %v323
        %v937 = vmul.f32 %v934, %v327
        %v938 = vmul.f32 %v934, %v331
        %v939 = vmul.f32 %v934, %v335
        %944 = vrot.lane.b32.xlu0 %v936, 91
        %v945 = vpop.permute.xlu0 %944
        %946 = vrot.lane.b32.xlu0 %v937, 91
        %v947 = vpop.permute.xlu0 %946
        %948 = vrot.lane.b32.xlu0 %v938, 91
        %v949 = vpop.permute.xlu0 %948
        %950 = vrot.lane.b32.xlu0 %v939, 91
        %v951 = vpop.permute.xlu0 %950
        %vm952 = vcmask 744448
        %v953 = vsel %vm952, %v945, %v947
        %v954 = vsel %vm952, %v947, %v949
        %v955 = vsel %vm952, %v949, %v951
        %v959 = vadd.f32 %v929, %v953
        %v960 = vadd.f32 %v930, %v954
        %v961 = vadd.f32 %v931, %v955
        %962 = vset.pattern.permute.xlu0 22
        %963 = vperm.xlu0 %962, %v177
        %v964 = vpop.permute.xlu0 %963
        %v966 = vmul.f32 %v964, %v389
        %v967 = vmul.f32 %v964, %v393
        %v968 = vmul.f32 %v964, %v397
        %v969 = vmul.f32 %v964, %v401
        %974 = vrot.lane.b32.xlu0 %v966, 91
        %v975 = vpop.permute.xlu0 %974
        %976 = vrot.lane.b32.xlu0 %v967, 91
        %v977 = vpop.permute.xlu0 %976
        %978 = vrot.lane.b32.xlu0 %v968, 91
        %v979 = vpop.permute.xlu0 %978
        %980 = vrot.lane.b32.xlu0 %v969, 91
        %v981 = vpop.permute.xlu0 %980
        %v982 = vsel %vm952, %v975, %v977
        %v983 = vsel %vm952, %v977, %v979
        %v984 = vsel %vm952, %v979, %v981
        %v988 = vadd.f32 %v959, %v982
        %v989 = vadd.f32 %v960, %v983
        %v990 = vadd.f32 %v961, %v984
        %991 = vset.pattern.permute.xlu0 23
        %992 = vperm.xlu0 %991, %v177
        %v993 = vpop.permute.xlu0 %992
        %v995 = vmul.f32 %v993, %v454
        %v996 = vmul.f32 %v993, %v458
        %v997 = vmul.f32 %v993, %v462
        %v998 = vmul.f32 %v993, %v466
        %1003 = vrot.lane.b32.xlu0 %v995, 91
        %v1004 = vpop.permute.xlu0 %1003
        %1005 = vrot.lane.b32.xlu0 %v996, 91
        %v1006 = vpop.permute.xlu0 %1005
        %1007 = vrot.lane.b32.xlu0 %v997, 91
        %v1008 = vpop.permute.xlu0 %1007
        %1009 = vrot.lane.b32.xlu0 %v998, 91
        %v1010 = vpop.permute.xlu0 %1009
        %v1011 = vsel %vm952, %v1004, %v1006
        %v1012 = vsel %vm952, %v1006, %v1008
        %v1013 = vsel %vm952, %v1008, %v1010
        %v1017 = vadd.f32 %v988, %v1011
        %v1018 = vadd.f32 %v989, %v1012
        %v1019 = vadd.f32 %v990, %v1013
        %1020 = vset.pattern.permute.xlu0 24
        %1021 = vperm.xlu0 %1020, %v177
        %v1022 = vpop.permute.xlu0 %1021
        %v1024 = vmul.f32 %v1022, %v323
        %v1025 = vmul.f32 %v1022, %v327
        %v1026 = vmul.f32 %v1022, %v331
        %v1027 = vmul.f32 %v1022, %v335
        %1032 = vrot.lane.b32.xlu0 %v1024, 90
        %v1033 = vpop.permute.xlu0 %1032
        %1034 = vrot.lane.b32.xlu0 %v1025, 90
        %v1035 = vpop.permute.xlu0 %1034
        %1036 = vrot.lane.b32.xlu0 %v1026, 90
        %v1037 = vpop.permute.xlu0 %1036
        %1038 = vrot.lane.b32.xlu0 %v1027, 90
        %v1039 = vpop.permute.xlu0 %1038
        %vm1040 = vcmask 736256
        %v1041 = vsel %vm1040, %v1033, %v1035
        %v1042 = vsel %vm1040, %v1035, %v1037
        %v1043 = vsel %vm1040, %v1037, %v1039
        %v1047 = vadd.f32 %v1017, %v1041
        %v1048 = vadd.f32 %v1018, %v1042
        %v1049 = vadd.f32 %v1019, %v1043
        %1050 = vset.pattern.permute.xlu0 25
        %1051 = vperm.xlu0 %1050, %v177
        %v1052 = vpop.permute.xlu0 %1051
        %v1054 = vmul.f32 %v1052, %v389
        %v1055 = vmul.f32 %v1052, %v393
        %v1056 = vmul.f32 %v1052, %v397
        %v1057 = vmul.f32 %v1052, %v401
        %1062 = vrot.lane.b32.xlu0 %v1054, 90
        %v1063 = vpop.permute.xlu0 %1062
        %1064 = vrot.lane.b32.xlu0 %v1055, 90
        %v1065 = vpop.permute.xlu0 %1064
        %1066 = vrot.lane.b32.xlu0 %v1056, 90
        %v1067 = vpop.permute.xlu0 %1066
        %1068 = vrot.lane.b32.xlu0 %v1057, 90
        %v1069 = vpop.permute.xlu0 %1068
        %v1070 = vsel %vm1040, %v1063, %v1065
        %v1071 = vsel %vm1040, %v1065, %v1067
        %v1072 = vsel %vm1040, %v1067, %v1069
        %v1076 = vadd.f32 %v1047, %v1070
        %v1077 = vadd.f32 %v1048, %v1071
        %v1078 = vadd.f32 %v1049, %v1072
        %1079 = vset.pattern.permute.xlu0 26
        %1080 = vperm.xlu0 %1079, %v177
        %v1081 = vpop.permute.xlu0 %1080
        %v1083 = vmul.f32 %v1081, %v454
        %v1084 = vmul.f32 %v1081, %v458
        %v1085 = vmul.f32 %v1081, %v462
        %v1086 = vmul.f32 %v1081, %v466
        %1091 = vrot.lane.b32.xlu0 %v1083, 90
        %v1092 = vpop.permute.xlu0 %1091
        %1093 = vrot.lane.b32.xlu0 %v1084, 90
        %v1094 = vpop.permute.xlu0 %1093
        %1095 = vrot.lane.b32.xlu0 %v1085, 90
        %v1096 = vpop.permute.xlu0 %1095
        %1097 = vrot.lane.b32.xlu0 %v1086, 90
        %v1098 = vpop.permute.xlu0 %1097
        %v1099 = vsel %vm1040, %v1092, %v1094
        %v1100 = vsel %vm1040, %v1094, %v1096
        %v1101 = vsel %vm1040, %v1096, %v1098
        %v1105 = vadd.f32 %v1076, %v1099
        %v1106 = vadd.f32 %v1077, %v1100
        %v1107 = vadd.f32 %v1078, %v1101
        %v1108 = vmax.f32 %v1105, 0.33333334
        %v1109 = vmax.f32 %v1106, 0.33333334
        %v1110 = vmax.f32 %v1107, 0.33333334
        %v1111 = vmin.f32 %v1108, 3.0
        %v1112 = vmin.f32 %v1109, 3.0
        %v1113 = vmin.f32 %v1110, 3.0
        %1114 = vst [vmem:[%s163] sm:$0xff] %v1111
        %1115 = vst [vmem:[%s163 + $0x8] sm:$0xff] %v1112
        %1116 = vst [vmem:[%s163 + $0x10] sm:$0xff] %v1113
        %s1117 = sand.u32 %s93, 1
        %s1118 = scalar_lea.sflag [#allocation3], %s1117
        %s1119 = sand.u32 %s93, 1
        %s1120 = smul.addr %s1119, 24
        %s1121 = scalar_lea.vmem [#allocation2], %s1120
        // Predicated region
        $region33: #{tpu_custom_call.1} parent=31 // pred_check
          %p1122 = pneg %p103
        $region34: #{tpu_custom_call.1} parent=31 // pred_check_branch
          %1124 = sbr.rel (%p1122) target = $region36
        $region35: #{tpu_custom_call.1} parent=31 // pred_region
          %s1126 = ssub.s32 384, 384
          %1127 = vsyncadd %s1118, %s1126
          %s1128 = smul.addr %s17, 3
          %s1129 = smul.addr %s1128, 128
          %s1130 = scalar_lea.hbm %s3, %s1129
          %s1132 = sshll.u32 %s1121, 4
          %s1133 = int_to_ptr.vmem [resolvable:$true] %s1132
          %1135 = dma.vmem_to_hbm [thread:$0]  %s1133, 384, %s1130, %s1118
        $region36: #{tpu_custom_call.1} parent=31 // pred_fallthru
          _
      $region32: #{tpu_custom_call.1} parent=5 // pred_fallthru
        _
      %p1136 = scmp.le.s32.totalorder 2, %s12
      // Predicated region
      $region37: #{tpu_custom_call.1} parent=5 // pred_check
        %p1137 = pneg %p1136
      $region38: #{tpu_custom_call.1} parent=5 // pred_check_branch
        %1139 = sbr.rel (%p1137) target = $region40
      $region39: #{tpu_custom_call.1} parent=5 // pred_region
        %s1140 = ssub.s32 %s12, 2
        // Predicated region
        $region41: #{tpu_custom_call.1} parent=39 // pred_check
          %p1141 = pneg %p109
        $region42: #{tpu_custom_call.1} parent=39 // pred_check_branch
          %1143 = sbr.rel (%p1141) target = $region44
        $region43: #{tpu_custom_call.1} parent=39 // pred_region
          %s1144 = sand.u32 %s94, 1
          %s1145 = scalar_lea.sflag [#allocation3], %s1144
          %s1146 = sand.u32 %s94, 1
          %s1147 = smul.addr %s1146, 24
          %s1148 = scalar_lea.vmem [#allocation2], %s1147
          %1149 = dma.done %s1145, 384
        $region44: #{tpu_custom_call.1} parent=39 // pred_fallthru
          _
      $region40: #{tpu_custom_call.1} parent=5 // pred_fallthru
        _
    $region6: #{tpu_custom_call.1} parent=1 // loop_footer
      %s16 = sadd.s32 1, %s12
    $region7: #{tpu_custom_call.1} parent=1 // loop_footer_branch
      %11 = sbr.rel target = $region3
    $region8: #{tpu_custom_call.1} parent=1 // loop_exit
      _
    %1150 = vsyncpa [#allocation3], 1
    %s1151 = scalar_lea.sflag [#allocation3], 1
    %1152 = vsyncpa %s1151, 1

</llo_original>
